<compile_context>
chip_gen: v6e
topology: v6e:2x2x1
jax: 0.10.0
libtpu: 0.0.40
codegen_flags: <defaults>
</compile_context>

<pallas_src>
import functools

import jax
import jax.numpy as jnp
from jax.experimental import pallas as pl
from jax.experimental.pallas import tpu as pltpu

_MAX_B_TILE = 32  # static in-kernel unroll bound for the batched 4D path


# ----------------------------------------------------------------------------
# Generation-aware VMEM / tile planning
# ----------------------------------------------------------------------------
def _vmem_plan():
    """Returns (vmem_limit_bytes, tile_budget_bytes, per_step_target_bytes)."""
    try:
        vmem_cap = int(pltpu.get_tpu_info().vmem_capacity_bytes)
    except Exception:  # pragma: no cover - conservative fallback
        vmem_cap = 128 * 1024 * 1024
    # Scoped-VMEM limit: 48 MiB on 128-MiB parts (v5e/v6e), ~40 MiB on v7x.
    vmem_limit = min(48 * 1024 * 1024, (vmem_cap * 5) // 8)
    # Budget for the double-buffered streamed tiles (headroom for the resident
    # weight + compiler internal scratch).
    tile_budget = (vmem_limit * 3) // 4
    # Per-grid-step HBM target: bigger on v7x, whose 3.2 TB/s HBM exposes the
    # fixed ~0.35 us step overhead more.
    target_bytes = (4 * 1024 * 1024 if vmem_cap <= 64 * 1024 * 1024
                    else 2 * 1024 * 1024)
    return vmem_limit, tile_budget, target_bytes


def _plan_channel_first(b, cin, cout, hw, itemsize, target_bytes, tile_budget):
    """Pick (t_hw, b_tile) for the channel-first (4D) kernel."""
    row_bytes = (cin + cout) * itemsize  # HBM bytes per HW element (in + out)
    # --- lane-axis tile ---
    if hw <= 128:
        t_hw = hw  # full-extent block (exempt from the 128-divisibility rule)
    else:
        want = max(128, target_bytes // row_bytes)
        cap = max(128, tile_budget // (2 * row_bytes))  # double-buffered in+out
        t_hw = min(want, cap, hw)
        t_hw = max(128, (t_hw // 128) * 128)
        if t_hw >= hw:
            t_hw = hw
    # --- batch tiling: only once one lane tile already covers all of HW ---
    b_tile = 1
    if t_hw == hw and b > 1:
        per_b = row_bytes * hw
        want_b = max(1, target_bytes // per_b)
        cap_b = max(1, tile_budget // (2 * per_b))
        b_tile = int(min(want_b, cap_b, b, _MAX_B_TILE))
        # keep at least 2 parallel grid steps (v7x shards the grid over 2 TCs)
        b_tile = min(b_tile, max(1, -(-b // 2)))
    # degenerate single-step grid with b == 1: split HW once so v7x's 2nd TC
    # is not guaranteed idle.
    if b_tile >= b and pl.cdiv(hw, t_hw) == 1 and hw > 256:
        t_hw = max(128, ((hw // 2) // 128) * 128)
    return int(t_hw), int(b_tile)


def _plan_channel_last(m, cin, cout, itemsize, target_bytes, tile_budget):
    """Pick t_m for the channel-last (2D/3D) kernel."""
    row_bytes = (cin + cout) * itemsize
    want = max(8, target_bytes // row_bytes)
    cap = max(8, tile_budget // (2 * row_bytes))
    t_m = min(want, cap, m)
    t_m = max(8, (t_m // 8) * 8)
    if t_m >= m:
        return int(m)  # full-extent block
    return int(t_m)


# ----------------------------------------------------------------------------
# Kernels
# ----------------------------------------------------------------------------
def _make_channel_first_kernel(b_tile):
    def kernel(w_ref, x_ref, o_ref):
        # w_ref: (Cout, Cin) VMEM-resident; x_ref: (b_tile, Cin, t_hw);
        # o_ref: (b_tile, Cout, t_hw).  Static small unroll over the batch
        # tile; each dot keeps the lane-dense t_hw axis on the output lanes.
        w = w_ref[...]
        for i in range(b_tile):
            o_ref[i, :, :] = jnp.dot(
                w, x_ref[i, :, :], preferred_element_type=jnp.float32
            ).astype(o_ref.dtype)
    return kernel


def _spmm_channel_last_kernel(x_ref, wt_ref, o_ref):
    # x_ref: (t_m, Cin); wt_ref: (Cin, Cout) resident; o_ref: (t_m, Cout)
    y = jnp.dot(x_ref[...], wt_ref[...], preferred_element_type=jnp.float32)
    o_ref[...] = y.astype(o_ref.dtype)


# ----------------------------------------------------------------------------
# Pallas wrappers
# ----------------------------------------------------------------------------
def _spmm_channel_first(w, x3, *, vmem_limit, tile_budget, target_bytes):
    """x3: (B, Cin, HW); w: (Cout, Cin) -> (B, Cout, HW)."""
    b, cin, hw = x3.shape
    cout = w.shape[0]
    itemsize = x3.dtype.itemsize

    t_hw, b_tile = _plan_channel_first(
        b, cin, cout, hw, itemsize, target_bytes, tile_budget)
    grid = (pl.cdiv(b, b_tile), pl.cdiv(hw, t_hw))

    cost = pl.CostEstimate(
        flops=2 * cout * cin * b * hw,
        transcendentals=0,
        bytes_accessed=(b * (cin + cout) * hw + cout * cin) * itemsize,
    )
    return pl.pallas_call(
        _make_channel_first_kernel(b_tile),
        out_shape=jax.ShapeDtypeStruct((b, cout, hw), x3.dtype),
        grid_spec=pltpu.PrefetchScalarGridSpec(
            num_scalar_prefetch=0,
            grid=grid,
            in_specs=[
                pl.BlockSpec((cout, cin), lambda i, j: (0, 0)),  # resident W
                pl.BlockSpec((b_tile, cin, t_hw), lambda i, j: (i, 0, j)),
            ],
            out_specs=pl.BlockSpec((b_tile, cout, t_hw), lambda i, j: (i, 0, j)),
        ),
        compiler_params=pltpu.CompilerParams(
            dimension_semantics=("parallel", "parallel"),
            vmem_limit_bytes=vmem_limit,
        ),
        cost_estimate=cost,
    )(w, x3)


def _spmm_channel_last(x2, w, *, vmem_limit, tile_budget, target_bytes):
    """x2: (M, Cin); w: (Cout, Cin) -> (M, Cout) = x2 @ w.T."""
    m, cin = x2.shape
    cout = w.shape[0]
    itemsize = x2.dtype.itemsize
    wt = jnp.transpose(w)  # (Cin, Cout), tiny

    t_m = _plan_channel_last(m, cin, cout, itemsize, target_bytes, tile_budget)
    grid = (pl.cdiv(m, t_m),)

    cost = pl.CostEstimate(
        flops=2 * cout * cin * m,
        transcendentals=0,
        bytes_accessed=(m * (cin + cout) + cin * cout) * itemsize,
    )
    return pl.pallas_call(
        _spmm_channel_last_kernel,
        out_shape=jax.ShapeDtypeStruct((m, cout), x2.dtype),
        grid_spec=pltpu.PrefetchScalarGridSpec(
            num_scalar_prefetch=0,
            grid=grid,
            in_specs=[
                pl.BlockSpec((t_m, cin), lambda i: (i, 0)),
                pl.BlockSpec((cin, cout), lambda i: (0, 0)),  # resident W^T
            ],
            out_specs=pl.BlockSpec((t_m, cout), lambda i: (i, 0)),
        ),
        compiler_params=pltpu.CompilerParams(
            dimension_semantics=("parallel",),
            vmem_limit_bytes=vmem_limit,
        ),
        cost_estimate=cost,
    )(x2, wt)


# ----------------------------------------------------------------------------
# Module forward
# ----------------------------------------------------------------------------
@functools.partial(jax.jit, static_argnames=("shape",))
def sparse_matrix_layer_forward(x, indices_float, values, shape):
    """Forward of SparseMatrixLayer.

    indices_float: (2, nnz) float indices (row in [0,cout), col in [0,cin)).
    values:        (nnz,) non-zero values.
    shape:         (cin, cout), matching the PyTorch `self.cin, self.cout`.
    """
    cin, cout = shape

    # TODO(synk): the COO->dense scatter-add (== sparse_coo_tensor + coalesce)
    # has no clean Pallas TPU scatter primitive; it is done once here in XLA on
    # the tiny (cout, cin) weight.  torch.round and jnp.round both use
    # round-half-to-even, so index semantics match; out-of-range indices are
    # silently dropped here (torch would raise).
    idx = jnp.round(indices_float).astype(jnp.int32)
    w = jnp.zeros((cout, cin), values.dtype).at[idx[0], idx[1]].add(values)
    # bf16 path: carry W in the activation dtype so the HBM-bound matmul
    # streams half the bytes for bf16 activations; MXU accumulates in f32.
    w = w.astype(x.dtype)

    vmem_limit, tile_budget, target_bytes = _vmem_plan()
    kwargs = dict(vmem_limit=vmem_limit, tile_budget=tile_budget,
                  target_bytes=target_bytes)

    if x.ndim == 4:
        b, in_f, h, wd = x.shape
        if in_f != cin:
            raise ValueError(f"Input in_features ({in_f}) != cin ({cin}).")
        out3 = _spmm_channel_first(w, x.reshape(b, in_f, h * wd), **kwargs)
        return out3.reshape(b, cout, h, wd)
    if x.ndim == 3:
        b, length, in_f = x.shape
        if in_f != cin:
            raise ValueError(f"Input in_features ({in_f}) != cin ({cin}).")
        out2 = _spmm_channel_last(x.reshape(b * length, in_f), w, **kwargs)
        return out2.reshape(b, length, cout)
    if x.ndim == 2:
        if x.shape[1] != cin:
            raise ValueError(f"Input in_features ({x.shape[1]}) != cin ({cin}).")
        return _spmm_channel_last(x, w, **kwargs)
    raise ValueError("Input tensor must be 2D, 3D, or 4D.")


# ----------------------------------------------------------------------------
# Demo / correctness check
# ----------------------------------------------------------------------------
if __name__ == "__main__":
    key = jax.random.PRNGKey(0)
    k_rows, k_cols, k_vals, k_x4, k_x3, k_x2 = jax.random.split(key, 6)

    B, CIN, COUT, H, W = 2, 4, 8, 16, 16
    NNZ = 12

    rows = jax.random.randint(k_rows, (NNZ,), 0, COUT)
    cols = jax.random.randint(k_cols, (NNZ,), 0, CIN)
    indices_float = jnp.stack([rows, cols]).astype(jnp.float32)  # stored as float, like the module
    values = jax.random.normal(k_vals, (NNZ,), dtype=jnp.float32)

    # Reference dense weight (== get_equiv_weight; duplicates summed like coalesce).
    w_dense = jnp.zeros((COUT, CIN), jnp.float32).at[rows, cols].add(values)

    # --- 4D (conv-style) main path ---
    x4 = jax.random.normal(k_x4, (B, CIN, H, W), dtype=jnp.float32)
    out4 = jax.block_until_ready(
        sparse_matrix_layer_forward(x4, indices_float, values, shape=(CIN, COUT)))
    ref4 = jnp.einsum("oc,bchw->bohw", w_dense, x4)
    assert out4.shape == (B, COUT, H, W)
    assert jnp.allclose(out4, ref4, atol=1e-5, rtol=1e-5)

    # --- 4D bf16 activation path (HBM-bound: half the streamed bytes) ---
    x4b = x4.astype(jnp.bfloat16)
    out4b = jax.block_until_ready(
        sparse_matrix_layer_forward(x4b, indices_float, values, shape=(CIN, COUT)))
    ref4b = jnp.einsum("oc,bchw->bohw",
                       w_dense.astype(jnp.bfloat16).astype(jnp.float32),
                       x4b.astype(jnp.float32))
    assert out4b.dtype == jnp.bfloat16
    assert jnp.allclose(out4b.astype(jnp.float32), ref4b, atol=5e-2, rtol=5e-2)

    # --- 3D (sequence) path ---
    x3 = jax.random.normal(k_x3, (B, 8, CIN), dtype=jnp.float32)
    out3 = jax.block_until_ready(
        sparse_matrix_layer_forward(x3, indices_float, values, shape=(CIN, COUT)))
    assert jnp.allclose(out3, jnp.einsum("blc,oc->blo", x3, w_dense),
                        atol=1e-5, rtol=1e-5)

    # --- 2D (linear) path ---
    x2 = jax.random.normal(k_x2, (8, CIN), dtype=jnp.float32)
    out2 = jax.block_until_ready(
        sparse_matrix_layer_forward(x2, indices_float, values, shape=(CIN, COUT)))
    assert jnp.allclose(out2, x2 @ w_dense.T, atol=1e-5, rtol=1e-5)

    print("KERNEL_OK")
</pallas_src>

<mosaic_0001>
module attributes {stable_mosaic.version = 11 : i64} {
  func.func @kernel(%arg0: i32, %arg1: i32, %arg2: memref<8x4xf32, #tpu.memory_space<vmem>>, %arg3: memref<1x4x256xf32, #tpu.memory_space<vmem>>, %arg4: memref<1x8x256xf32, #tpu.memory_space<vmem>>) attributes {dimension_semantics = [#tpu.dimension_semantics<parallel>, #tpu.dimension_semantics<parallel>], iteration_bounds = array<i64: 2, 1>, scalar_prefetch = 0 : i64, scratch_operands = 0 : i64, tpu.core_type = #tpu.core_type<tc>, window_params = [{pipeline_mode = #tpu.pipeline_mode<synchronous>, transform_indices = @transform_0, window_bounds = array<i64: 8, 4>}, {transform_indices = @transform_1, window_bounds = array<i64: 1, 4, 256>}, {transform_indices = @transform_2, window_bounds = array<i64: 1, 8, 256>}]} {
    %c0 = arith.constant 0 : index
    %c0_0 = arith.constant 0 : index
    %0 = vector.load %arg2[%c0, %c0_0] : memref<8x4xf32, #tpu.memory_space<vmem>>, vector<8x4xf32>
    %c0_1 = arith.constant 0 : index
    %c0_2 = arith.constant 0 : index
    %c0_3 = arith.constant 0 : index
    %1 = vector.load %arg3[%c0_1, %c0_2, %c0_3] : memref<1x4x256xf32, #tpu.memory_space<vmem>>, vector<1x4x256xf32>
    %2 = vector.shape_cast %1 : vector<1x4x256xf32> to vector<4x256xf32>
    %cst = arith.constant dense<0.000000e+00> : vector<8x256xf32>
    %3 = tpu.matmul %0, %2, %cst {dimension_numbers = #tpu.dot_dimension_numbers<[1], [0], [0], [1], [0, 0, 1, 1], [], []>} : vector<8x4xf32>, vector<4x256xf32>, vector<8x256xf32> -> vector<8x256xf32>
    %c0_4 = arith.constant 0 : index
    %c0_5 = arith.constant 0 : index
    %c0_6 = arith.constant 0 : index
    %4 = vector.load %arg4[%c0_4, %c0_5, %c0_6] : memref<1x8x256xf32, #tpu.memory_space<vmem>>, vector<1x8x256xf32>
    %5 = vector.shape_cast %4 : vector<1x8x256xf32> to vector<8x256xf32>
    %6 = vector.shape_cast %3 : vector<8x256xf32> to vector<1x8x256xf32>
    tpu.vector_store %arg4[%c0_4, %c0_5, %c0_6], %6 {strides = array<i32>} : memref<1x8x256xf32, #tpu.memory_space<vmem>>, vector<1x8x256xf32>,
    return
  }
  func.func @transform_0(%arg0: i32, %arg1: i32) -> (i32, i32) {
    %c0_i32 = arith.constant 0 : i32
    %c0_i32_0 = arith.constant 0 : i32
    %c0_i32_1 = arith.constant 0 : i32
    return %c0_i32, %c0_i32_0 : i32, i32
  }
  func.func @transform_1(%arg0: i32, %arg1: i32) -> (i32, i32, i32) {
    %c0_i32 = arith.constant 0 : i32
    %c0_i32_0 = arith.constant 0 : i32
    return %arg0, %c0_i32, %arg1 : i32, i32, i32
  }
  func.func @transform_2(%arg0: i32, %arg1: i32) -> (i32, i32, i32) {
    %c0_i32 = arith.constant 0 : i32
    %c0_i32_0 = arith.constant 0 : i32
    return %arg0, %c0_i32, %arg1 : i32, i32, i32
  }
}

</mosaic_0001>

<llo_original>
// kernel: sparse_matrix_layer_forward.1
$region0: #{sparse_matrix_layer_forward.1}
  #allocation0 [shape = 'u32[]', space=smem, size = 0x4, offset = 0x4, fixed_abs, tag = 'smem constant byte address 0x4 - core index']
  #allocation1 [shape = 'u32[144,128]{1,0:T(1,128)}', space=vmem, size = 0x12000, scoped, tag = 'internal scratch']
  %s0 = inlined_call_operand.vmem [shape: f32[8,4], index: 0, kind: input, shape index: {}]
  %s1 = inlined_call_operand.vmem [shape: f32[2,4,256], index: 1, kind: input, shape index: {}]
  %s2 = inlined_call_operand.vmem [shape: f32[2,8,256], index: 2, kind: output, shape index: {}]
  %s3 = sld [smem:[#allocation0]]
  $region41: #{sparse_matrix_layer_forward.1} parent=0
    _
  %s5 = ssub.s32 1, %s3
  %s6 = scalar_select 0, %s5, %s3
  loop: start=0, step=1, limit=4
  $region2: #{sparse_matrix_layer_forward.1} parent=0 // loop_pre_header
    _
  $region3: #{sparse_matrix_layer_forward.1} parent=0 // loop_header
    %s8 = sphi 0, %s12
    %p9 = scmp.ge.s32.totalorder %s8, 4
    %s15 = sphi 0, %s27
    %s16 = sphi 0, %s23
    %s17 = sphi 0, %s15
    %s18 = sphi 0, %s16
    %s19 = sphi 0, %s17
    %s20 = sphi 0, %s18
    %s28 = sphi 0, %s28
    %s30 = sphi 0, %s28
    %s31 = sphi 0, %s30
    %s45 = sphi 0, %s31
    %s53 = sphi 0, %s55
    %s56 = sphi 0, %s53
    %s57 = sphi 0, %s56
    %s73 = sphi 0, %s57
    %s81 = sphi 0, %s83
    %s84 = sphi 0, %s81
    %s85 = sphi 0, %s84
    %s101 = sphi 0, %s85
  $region4: #{sparse_matrix_layer_forward.1} parent=0 // loop_header_branch
    %11 = sbr.rel (%p9) target = $region8
  $region5: #{sparse_matrix_layer_forward.1} parent=0 // loop_body
    %s13 = ssub.s32 %s8, 1
    %s14 = ssub.s32 %s8, 2
    %s21 = sadd.s32 1, %s16
    %p22 = scmp.ge.s32.totalorder %s21, 1
    %s23 = scalar_select %p22, 0, %s21
    %s24 = sadd.s32 1, %s15
    %s25 = scalar_select %p22, %s24, %s15
    %p26 = scmp.ge.s32.totalorder %s25, 2
    %s27 = scalar_select %p26, 0, %s25
    %s29 = sadd.s32 %s28, 1
    %p32 = scmp.eq.s32.totalorder %s8, 1
    %p33 = scmp.ne.s32.totalorder %s28, %s30
    %p34 = scmp.eq.s32.totalorder %s8, 0
    %p35 = por %p33, %p34
    %p36 = scmp.ne.s32.totalorder %s28, %s30
    %p37 = scmp.eq.s32.totalorder %s13, 1
    %p38 = por %p36, %p37
    %p39 = scmp.ne.s32.totalorder %s30, %s31
    %p40 = scmp.eq.s32.totalorder %s13, 0
    %p41 = por %p39, %p40
    %p42 = scmp.ne.s32.totalorder %s30, %s31
    %p43 = scmp.eq.s32.totalorder %s14, 1
    %p44 = por %p42, %p43
    %p46 = scmp.ne.s32.totalorder %s31, %s45
    %p47 = scmp.eq.s32.totalorder %s14, 0
    %p48 = por %p46, %p47
    %s49 = ssub.s32 %s15, %s27
    %s50 = ssub.s32 %s16, %s23
    %s51 = sor.u32 %s49, %s50
    %p52 = scmp.eq.s32.totalorder %s51, 0
    %s54 = sadd.s32 %s53, 1
    %s55 = scalar_select %p52, %s53, %s54
    %p58 = pneg %p52
    %p59 = scmp.eq.s32.totalorder %s8, 1
    %p60 = por %p58, %p59
    %p61 = scmp.ne.s32.totalorder %s53, %s56
    %p62 = scmp.eq.s32.totalorder %s8, 0
    %p63 = por %p61, %p62
    %p64 = scmp.ne.s32.totalorder %s53, %s56
    %p65 = scmp.eq.s32.totalorder %s13, 1
    %p66 = por %p64, %p65
    %p67 = scmp.ne.s32.totalorder %s56, %s57
    %p68 = scmp.eq.s32.totalorder %s13, 0
    %p69 = por %p67, %p68
    %p70 = scmp.ne.s32.totalorder %s56, %s57
    %p71 = scmp.eq.s32.totalorder %s14, 1
    %p72 = por %p70, %p71
    %p74 = scmp.ne.s32.totalorder %s57, %s73
    %p75 = scmp.eq.s32.totalorder %s14, 0
    %p76 = por %p74, %p75
    %s77 = ssub.s32 %s15, %s27
    %s78 = ssub.s32 %s16, %s23
    %s79 = sor.u32 %s77, %s78
    %p80 = scmp.eq.s32.totalorder %s79, 0
    %s82 = sadd.s32 %s81, 1
    %s83 = scalar_select %p80, %s81, %s82
    %p86 = pneg %p80
    %p87 = scmp.eq.s32.totalorder %s8, 1
    %p88 = por %p86, %p87
    %p89 = scmp.ne.s32.totalorder %s81, %s84
    %p90 = scmp.eq.s32.totalorder %s8, 0
    %p91 = por %p89, %p90
    %p92 = scmp.ne.s32.totalorder %s81, %s84
    %p93 = scmp.eq.s32.totalorder %s13, 1
    %p94 = por %p92, %p93
    %p95 = scmp.ne.s32.totalorder %s84, %s85
    %p96 = scmp.eq.s32.totalorder %s13, 0
    %p97 = por %p95, %p96
    %p98 = scmp.ne.s32.totalorder %s84, %s85
    %p99 = scmp.eq.s32.totalorder %s14, 1
    %p100 = por %p98, %p99
    %p102 = scmp.ne.s32.totalorder %s85, %s101
    %p103 = scmp.eq.s32.totalorder %s14, 0
    %p104 = por %p102, %p103
    %p105 = scmp.le.s32.totalorder 1, %s8
    %p106 = scmp.lt.s32.totalorder %s8, 3
    %p107 = pnand %p105, %p106
    %p108 = pneg %p107
    // Predicated region
    $region9: #{sparse_matrix_layer_forward.1} parent=5 // pred_check
      _
    $region10: #{sparse_matrix_layer_forward.1} parent=5 // pred_check_branch
      %110 = sbr.rel (%p107) target = $region12
    $region11: #{sparse_matrix_layer_forward.1} parent=5 // pred_region
      %s111 = ssub.s32 %s8, 1
      // Predicated region
      $region13: #{sparse_matrix_layer_forward.1} parent=11 // pred_check
        %p112 = pneg %p41
      $region14: #{sparse_matrix_layer_forward.1} parent=11 // pred_check_branch
        %114 = sbr.rel (%p112) target = $region16
      $region15: #{sparse_matrix_layer_forward.1} parent=11 // pred_region
        _
      $region16: #{sparse_matrix_layer_forward.1} parent=11 // pred_fallthru
        _
    $region12: #{sparse_matrix_layer_forward.1} parent=5 // pred_fallthru
      _
    %p115 = scmp.lt.s32.totalorder %s8, 2
    // Predicated region
    $region17: #{sparse_matrix_layer_forward.1} parent=5 // pred_check
      %p116 = pneg %p115
    $region18: #{sparse_matrix_layer_forward.1} parent=5 // pred_check_branch
      %118 = sbr.rel (%p116) target = $region20
    $region19: #{sparse_matrix_layer_forward.1} parent=5 // pred_region
      // Predicated region
      $region21: #{sparse_matrix_layer_forward.1} parent=19 // pred_check
        %p119 = pneg %p63
      $region22: #{sparse_matrix_layer_forward.1} parent=19 // pred_check_branch
        %121 = sbr.rel (%p119) target = $region24
      $region23: #{sparse_matrix_layer_forward.1} parent=19 // pred_region
        %s122 = smul.u32 2, %s16
        %p123 = scmp.lt.s32.totalorder %s15, 1
        %s124 = scalar_select %p123, %s15, 1
        %p125 = scmp.lt.s32.totalorder %s122, 1
        %s126 = scalar_select %p125, %s122, 1
        %s127 = smul.addr %s124, 2
        %s128 = sadd.s32 %s126, %s127
        %s129 = smul.addr %s128, 4
        %s130 = scalar_lea.vmem %s1, %s129
        %s131 = smul.u32 2, %s16
      $region24: #{sparse_matrix_layer_forward.1} parent=19 // pred_fallthru
        _
    $region20: #{sparse_matrix_layer_forward.1} parent=5 // pred_fallthru
      _
    %p132 = scmp.le.s32.totalorder 1, %s8
    %p133 = scmp.lt.s32.totalorder %s8, 3
    %p134 = pnand %p132, %p133
    %p135 = pneg %p134
    // Predicated region
    $region25: #{sparse_matrix_layer_forward.1} parent=5 // pred_check
      _
    $region26: #{sparse_matrix_layer_forward.1} parent=5 // pred_check_branch
      %137 = sbr.rel (%p134) target = $region28
    $region27: #{sparse_matrix_layer_forward.1} parent=5 // pred_region
      %s138 = ssub.s32 %s8, 1
      %p139 = pneg %p41
      %p140 = pneg %p38
      %s141 = smul.u32 2, %s18
      %p142 = scmp.lt.s32.totalorder %s17, 1
      %s143 = scalar_select %p142, %s17, 1
      %p144 = scmp.lt.s32.totalorder %s141, 1
      %s145 = scalar_select %p144, %s141, 1
      %s146 = smul.addr %s143, 2
      %s147 = sadd.s32 %s145, %s146
      %s148 = smul.addr %s147, 4
      %s149 = scalar_lea.vmem %s1, %s148
      %p150 = pneg %p69
      %p151 = pneg %p66
      %p152 = pneg %p97
      %p153 = pneg %p94
      %s154 = smul.u32 2, %s18
      %p155 = scmp.lt.s32.totalorder %s17, 1
      %s156 = scalar_select %p155, %s17, 1
      %p157 = scmp.lt.s32.totalorder %s154, 1
      %s158 = scalar_select %p157, %s154, 1
      %s159 = smul.addr %s156, 2
      %s160 = sadd.s32 %s158, %s159
      %s161 = smul.addr %s160, 8
      %s162 = scalar_lea.vmem %s2, %s161
      %s163 = smul.u32 2, %s18
      %p164 = scmp.lt.s32.totalorder %s17, 1
      %s165 = scalar_select %p164, %s17, 1
      %p166 = scmp.lt.s32.totalorder %s163, 1
      %s167 = scalar_select %p166, %s163, 1
      %s168 = smul.addr %s165, 2
      %s169 = sadd.s32 %s167, %s168
      %s170 = smul.addr %s169, 4
      %s171 = scalar_lea.vmem %s1, %s170
      %s172 = smul.u32 2, %s18
      %s173 = smul.u32 2, %s18
      %p174 = scmp.lt.s32.totalorder %s17, 1
      %s175 = scalar_select %p174, %s17, 1
      %p176 = scmp.lt.s32.totalorder %s173, 1
      %s177 = scalar_select %p176, %s173, 1
      %s178 = smul.addr %s175, 2
      %s179 = sadd.s32 %s177, %s178
      %s180 = smul.addr %s179, 8
      %s181 = scalar_lea.vmem %s2, %s180
      %s182 = smul.u32 2, %s18
      %v183 = vld [vmem:[%s0] sm:$0xff]
      %v184 = vld [vmem:[%s171] sm:$0xff]
      %v186 = vcombine.high %v184, %v184
      %vm187 = vcmask 31744
      %v189 = vsel %vm187, %v183, 0
      %vm191 = vcmask 1043456
      %v192 = vsel %vm191, %v184, 0
      %v194 = vsel %vm191, %v186, 0
      %196 = vmatprep.subr.mxu0 0.0
      %197 = vmatpush1.msra.mxu0 0.0
      %198 = vmatprep.subr.mxu0 0.0
      %199 = vmatpush1.msra.mxu0 0.0
      %200 = vmatprep.subr.mxu0 0.0
      %201 = vmatpush1.msra.mxu0 0.0
      %202 = vmatprep.subr.mxu0 0.0
      %203 = vmatpush1.msra.mxu0 0.0
      %204 = vmatprep.subr.mxu0 0.0
      %205 = vmatpush1.msra.mxu0 0.0
      %206 = vmatprep.subr.mxu0 0.0
      %207 = vmatpush1.msra.mxu0 0.0
      %208 = vmatprep.subr.mxu0 0.0
      %209 = vmatpush1.msra.mxu0 0.0
      %210 = vmatprep.subr.mxu0 0.0
      %211 = vmatpush1.msra.mxu0 0.0
      %212 = vmatprep.subr.mxu0 0.0
      %213 = vmatpush1.msra.mxu0 0.0
      %214 = vmatprep.subr.mxu0 0.0
      %215 = vmatpush1.msra.mxu0 0.0
      %216 = vmatprep.subr.mxu0 0.0
      %217 = vmatpush1.msra.mxu0 0.0
      %218 = vmatprep.subr.mxu0 0.0
      %219 = vmatpush1.msra.mxu0 0.0
      %220 = vmatprep.subr.mxu0 0.0
      %221 = vmatpush1.msra.mxu0 0.0
      %222 = vmatprep.subr.mxu0 0.0
      %223 = vmatpush1.msra.mxu0 0.0
      %224 = vmatprep.subr.mxu0 0.0
      %225 = vmatpush1.msra.mxu0 0.0
      %226 = vmatprep.subr.mxu0 %v194
      %227 = vmatpush1.msra.mxu0 %v192
      %228 = vmatprep.subr.mxu0 0.0
      %229 = vmatpush2.msra.mxu0 0.0
      %230 = vmatprep.subr.mxu0 0.0
      %231 = vmatpush2.msra.mxu0 0.0
      %232 = vmatprep.subr.mxu0 0.0
      %233 = vmatpush2.msra.mxu0 0.0
      %234 = vmatprep.subr.mxu0 0.0
      %235 = vmatpush2.msra.mxu0 0.0
      %236 = vmatprep.subr.mxu0 0.0
      %237 = vmatpush2.msra.mxu0 0.0
      %238 = vmatprep.subr.mxu0 0.0
      %239 = vmatpush2.msra.mxu0 0.0
      %240 = vmatprep.subr.mxu0 0.0
      %241 = vmatpush2.msra.mxu0 0.0
      %242 = vmatprep.subr.mxu0 0.0
      %243 = vmatpush2.msra.mxu0 0.0
      %244 = vmatprep.subr.mxu0 0.0
      %245 = vmatpush2.msra.mxu0 0.0
      %246 = vmatprep.subr.mxu0 0.0
      %247 = vmatpush2.msra.mxu0 0.0
      %248 = vmatprep.subr.mxu0 0.0
      %249 = vmatpush2.msra.mxu0 0.0
      %250 = vmatprep.subr.mxu0 0.0
      %251 = vmatpush2.msra.mxu0 0.0
      %252 = vmatprep.subr.mxu0 0.0
      %253 = vmatpush2.msra.mxu0 0.0
      %254 = vmatprep.subr.mxu0 0.0
      %255 = vmatpush2.msra.mxu0 0.0
      %256 = vmatprep.subr.mxu0 0.0
      %257 = vmatpush2.msra.mxu0 0.0
      %258 = vmatprep.subr.mxu0 0.0
      %259 = vmatpush2.msra.mxu0 0.0
      %260 = vmatprep.mubr.f32.mxu0 0.0
      %261 = vmatmul.mubr.f32.gmra.mxu0 %v189
      %v262 = vpop.f32.mrf.mxu0
      %v263 = vadd.f32 0.0, %v262
      %v264 = vpop.f32.mrf.mxu0
      %v265 = vadd.f32 0.0, %v264
      %266 = vdwg.mxu0
      %267 = vst [vmem:[%s181] sm:$0xff] %v263
      %268 = vst [vmem:[%s181 + $0x8] sm:$0xff] %v265
      %s269 = smul.u32 2, %s18
      %p270 = scmp.lt.s32.totalorder %s17, 1
      %s271 = scalar_select %p270, %s17, 1
      %p272 = scmp.lt.s32.totalorder %s269, 1
      %s273 = scalar_select %p272, %s269, 1
      %s274 = smul.addr %s271, 2
      %s275 = sadd.s32 %s273, %s274
      %s276 = smul.addr %s275, 8
      %s277 = scalar_lea.vmem %s2, %s276
      // Predicated region
      $region29: #{sparse_matrix_layer_forward.1} parent=27 // pred_check
        %p278 = pneg %p94
      $region30: #{sparse_matrix_layer_forward.1} parent=27 // pred_check_branch
        %280 = sbr.rel (%p278) target = $region32
      $region31: #{sparse_matrix_layer_forward.1} parent=27 // pred_region
        %s281 = smul.u32 2, %s18
      $region32: #{sparse_matrix_layer_forward.1} parent=27 // pred_fallthru
        _
    $region28: #{sparse_matrix_layer_forward.1} parent=5 // pred_fallthru
      _
    %p282 = scmp.le.s32.totalorder 2, %s8
    // Predicated region
    $region33: #{sparse_matrix_layer_forward.1} parent=5 // pred_check
      %p283 = pneg %p282
    $region34: #{sparse_matrix_layer_forward.1} parent=5 // pred_check_branch
      %285 = sbr.rel (%p283) target = $region36
    $region35: #{sparse_matrix_layer_forward.1} parent=5 // pred_region
      %s286 = ssub.s32 %s8, 2
      // Predicated region
      $region37: #{sparse_matrix_layer_forward.1} parent=35 // pred_check
        %p287 = pneg %p100
      $region38: #{sparse_matrix_layer_forward.1} parent=35 // pred_check_branch
        %289 = sbr.rel (%p287) target = $region40
      $region39: #{sparse_matrix_layer_forward.1} parent=35 // pred_region
        %s290 = smul.u32 2, %s20
        %p291 = scmp.lt.s32.totalorder %s19, 1
        %s292 = scalar_select %p291, %s19, 1
        %p293 = scmp.lt.s32.totalorder %s290, 1
        %s294 = scalar_select %p293, %s290, 1
        %s295 = smul.addr %s292, 2
        %s296 = sadd.s32 %s294, %s295
        %s297 = smul.addr %s296, 8
        %s298 = scalar_lea.vmem %s2, %s297
      $region40: #{sparse_matrix_layer_forward.1} parent=35 // pred_fallthru
        _
    $region36: #{sparse_matrix_layer_forward.1} parent=5 // pred_fallthru
      _
  $region6: #{sparse_matrix_layer_forward.1} parent=0 // loop_footer
    %s12 = sadd.s32 1, %s8
  $region7: #{sparse_matrix_layer_forward.1} parent=0 // loop_footer_branch
    %7 = sbr.rel target = $region3
  $region8: #{sparse_matrix_layer_forward.1} parent=0 // loop_exit
    _

</llo_original>
